<compile_context>
chip_gen: v7x
topology: tpu7x:2x2x1
jax: 0.10.0
libtpu: 0.0.40
codegen_flags: <defaults>
</compile_context>

<pallas_src>
import numpy as np
import jax
import jax.numpy as jnp
from jax import lax
from jax.experimental import pallas as pl
from jax.experimental.pallas import tpu as pltpu

FILL_KEY = -10000000000.0  # same fill value as the reference module


def _sort_pool_kernel(key_ref, x_ref, pooled_ref, perm_ref, mask_ref):
    """One grid step == G graphs.

    key_ref   : VMEM f32[G, 1, M]       fill-padded sort keys, lane layout
    x_ref     : VMEM f32[G, M, C+3]     [x | fill-padded key | slot index | valid]
    pooled_ref: VMEM f32[G, k, C]
    perm_ref  : VMEM i32[G, k, 1]
    mask_ref  : VMEM i32[G, k, 1]       (cast to bool outside)
    """
    G, _, M = key_ref.shape
    C_aug = x_ref.shape[2]
    C = C_aug - 3
    k = pooled_ref.shape[1]

    key_row = key_ref[...]                  # (G, 1, M)  key[j] along lanes
    x_aug = x_ref[...]                      # (G, M, C+3)
    key_col = x_aug[:, :, C:C + 1]          # (G, M, 1)  key[i] along sublanes
                                            # (free slice of the x block; padded
                                            #  slots already carry FILL_KEY)

    # Stable descending order: node m "beats" node j iff
    #   key[m] > key[j]  or  (key[m] == key[j] and m < j)
    # rank[j] = #beaters of j  (== position of j in the sorted order).
    # TODO(synk): chunk the M x M comparison over the lane axis for very large
    # graphs (keeps peak VMEM bounded on v7x's 64 MiB VMEM).
    m_idx = lax.broadcasted_iota(jnp.int32, (G, M, M), 1)
    j_idx = lax.broadcasted_iota(jnp.int32, (G, M, M), 2)
    gt = key_col > key_row                                        # (G, M, M)
    eq_before = jnp.logical_and(key_col == key_row, m_idx < j_idx)
    beats = jnp.logical_or(gt, eq_before).astype(jnp.float32)     # (G, M, M)

    # Rank reduction on the MXU (exact: integer-valued f32, M << 2^24).
    ones = jnp.ones((G, 1, M), jnp.float32)
    rank_f = jnp.einsum("gom,gmj->goj", ones, beats,
                        preferred_element_type=jnp.float32)       # (G, 1, M)
    rank = rank_f.astype(jnp.int32)                               # exact cast

    # One-hot selection built directly in (k, M) layout (slots on sublanes,
    # nodes on lanes) so the gather needs no transpose.
    t_idx = lax.broadcasted_iota(jnp.int32, (G, k, M), 1)
    sel = (rank == t_idx).astype(jnp.float32)                     # (G, k, M)

    # Single MXU gather produces pooled features, perm and mask at once.
    gathered = jnp.einsum("gkm,gmc->gkc", sel, x_aug,
                          preferred_element_type=jnp.float32)     # (G, k, C+3)

    pooled_ref[...] = gathered[:, :, :C].astype(pooled_ref.dtype)

    slot = lax.broadcasted_iota(jnp.int32, (G, k, 1), 1)
    idx_f = gathered[:, :, C + 1:C + 2]                           # gathered slot index
    perm_ref[...] = jnp.where(slot < M, idx_f.astype(jnp.int32), -1)

    valid_f = gathered[:, :, C + 2:C + 3]                         # 1.0 iff valid node
    mask_ref[...] = (valid_f > 0.5).astype(jnp.int32)


def sort_pooling(x, batch, k, graphs_per_block=None):
    """JAX/Pallas equivalent of SortPooling(k).forward(x, batch)."""
    if k <= 0:
        raise ValueError("SortPooling k must be a positive integer.")
    x = jnp.asarray(x, jnp.float32)
    batch_np = np.asarray(batch, np.int64)
    N, C = x.shape
    B = int(batch_np.max()) + 1
    counts = np.bincount(batch_np, minlength=B).astype(np.int64)
    M = int(counts.max())

    # --- glue: vectorized to_dense_batch positions (no per-node Python loop) --
    order = np.argsort(batch_np, kind="stable")
    starts = np.concatenate([[0], np.cumsum(counts)[:-1]])
    pos = np.empty(N, np.int64)
    pos[order] = np.arange(N, dtype=np.int64) - starts[batch_np[order]]

    # Graphs per grid step: amortize step overhead, bounded by a rough VMEM
    # budget for the (G, M, M) comparison intermediates.
    if graphs_per_block is None:
        vmem_cap = max(1, (8 * 1024 * 1024) // max(1, 8 * M * M))
        graphs_per_block = max(1, min(B, 8, vmem_cap))
    G = int(graphs_per_block)
    B_pad = ((B + G - 1) // G) * G            # pad batch dim with empty graphs

    C_aug = C + 3
    batch_j = jnp.asarray(batch_np, jnp.int32)
    pos_j = jnp.asarray(pos, jnp.int32)

    # Augmented dense node tensor: [x | fill-padded key | dense slot index | valid]
    base = jnp.zeros((B_pad, M, C_aug), jnp.float32)
    base = base.at[:, :, C].set(FILL_KEY)
    base = base.at[:, :, C + 1].set(jnp.arange(M, dtype=jnp.float32)[None, :])
    rows = jnp.concatenate(
        [x, x[:, -1:], pos_j.astype(jnp.float32)[:, None],
         jnp.ones((N, 1), jnp.float32)], axis=1)
    dense_aug = base.at[batch_j, pos_j].set(rows)

    dense_key = (jnp.full((B_pad, M), FILL_KEY, jnp.float32)
                 .at[batch_j, pos_j].set(x[:, -1]))[:, None, :]   # (B_pad, 1, M)
    # ------------------------------------------------------------------------

    pooled, perm, mask_i32 = pl.pallas_call(
        _sort_pool_kernel,
        out_shape=(jax.ShapeDtypeStruct((B_pad, k, C), jnp.float32),
                   jax.ShapeDtypeStruct((B_pad, k, 1), jnp.int32),
                   jax.ShapeDtypeStruct((B_pad, k, 1), jnp.int32)),
        grid_spec=pltpu.PrefetchScalarGridSpec(
            num_scalar_prefetch=0,
            grid=(B_pad // G,),
            in_specs=[pl.BlockSpec((G, 1, M), lambda b: (b, 0, 0)),
                      pl.BlockSpec((G, M, C_aug), lambda b: (b, 0, 0))],
            out_specs=(pl.BlockSpec((G, k, C), lambda b: (b, 0, 0)),
                       pl.BlockSpec((G, k, 1), lambda b: (b, 0, 0)),
                       pl.BlockSpec((G, k, 1), lambda b: (b, 0, 0)))),
        compiler_params=pltpu.CompilerParams(
            dimension_semantics=("parallel",)),
    )(dense_key, dense_aug)

    pooled = pooled[:B]
    perm = perm[:B, :, 0]
    mask = mask_i32[:B, :, 0].astype(jnp.bool_)
    return pooled, perm, mask


def reference_sort_pooling(x, batch, k):
    """Pure numpy reference with stable descending tie-break (matches kernel)."""
    x = np.asarray(x, np.float32)
    batch = np.asarray(batch, np.int64)
    N, C = x.shape
    B = int(batch.max()) + 1
    counts = np.bincount(batch, minlength=B)
    M = int(counts.max())
    pos = np.zeros(N, np.int64)
    seen = np.zeros(B, np.int64)
    for i, g in enumerate(batch):
        pos[i] = seen[g]
        seen[g] += 1
    dense_x = np.zeros((B, M, C), np.float32)
    dense_x[batch, pos] = x
    dense_key = np.full((B, M), FILL_KEY, np.float32)
    dense_key[batch, pos] = x[:, -1]
    order = np.argsort(-dense_key, axis=-1, kind="stable")
    sorted_x = np.take_along_axis(dense_x, order[:, :, None], axis=1)
    if M >= k:
        pooled = sorted_x[:, :k]
        perm = order[:, :k]
    else:
        pad = k - M
        pooled = np.pad(sorted_x, ((0, 0), (0, pad), (0, 0)))
        perm = np.pad(order, ((0, 0), (0, pad)), constant_values=-1)
    mask = np.zeros((B, k), bool)
    for i in range(B):
        mask[i, :min(int(counts[i]), k)] = True
    return pooled, perm.astype(np.int32), mask


if __name__ == "__main__":
    root = jax.random.PRNGKey(0)
    k1, k2 = jax.random.split(root)
    C = 8

    cases = []

    # Case 1: 3 graphs with 5, 3, 7 nodes; k=5 <= M=7.
    batch_a = np.array([0] * 5 + [1] * 3 + [2] * 7, dtype=np.int32)
    x_a = jax.random.normal(k1, (batch_a.shape[0], C), dtype=jnp.float32)
    cases.append((x_a, batch_a, 5))

    # Case 2: same graphs, k=10 > M=7 (exercises -1 perm / zero padding path).
    cases.append((x_a, batch_a, 10))

    # Case 3: 10 graphs of varying sizes -> multi-step grid + batch-dim padding.
    sizes = [3, 7, 2, 5, 6, 4, 1, 7, 3, 5]
    batch_c = np.repeat(np.arange(len(sizes), dtype=np.int32), sizes)
    x_c = jax.random.normal(k2, (batch_c.shape[0], C), dtype=jnp.float32)
    cases.append((x_c, batch_c, 5))

    for xb, bb, kk in cases:
        pooled, perm, mask = sort_pooling(xb, bb, kk)
        jax.block_until_ready((pooled, perm, mask))
        ref_pooled, ref_perm, ref_mask = reference_sort_pooling(np.asarray(xb), bb, kk)
        np.testing.assert_allclose(np.asarray(pooled), ref_pooled, rtol=1e-6, atol=1e-6)
        np.testing.assert_array_equal(np.asarray(perm), ref_perm)
        np.testing.assert_array_equal(np.asarray(mask), ref_mask)

    print("KERNEL_OK")
</pallas_src>

<mosaic_0001>
module attributes {stable_mosaic.version = 11 : i64} {
  func.func @_sort_pool_kernel(%arg0: i32, %arg1: memref<3x1x7xf32, #tpu.memory_space<vmem>>, %arg2: memref<3x7x11xf32, #tpu.memory_space<vmem>>, %arg3: memref<3x5x8xf32, #tpu.memory_space<vmem>>, %arg4: memref<3x5x1xi32, #tpu.memory_space<vmem>>, %arg5: memref<3x5x1xi32, #tpu.memory_space<vmem>>) attributes {dimension_semantics = [#tpu.dimension_semantics<parallel>], iteration_bounds = array<i64: 1>, scalar_prefetch = 0 : i64, scratch_operands = 0 : i64, tpu.core_type = #tpu.core_type<tc>, window_params = [{transform_indices = @transform_0, window_bounds = array<i64: 3, 1, 7>}, {transform_indices = @transform_1, window_bounds = array<i64: 3, 7, 11>}, {transform_indices = @transform_2, window_bounds = array<i64: 3, 5, 8>}, {transform_indices = @transform_3, window_bounds = array<i64: 3, 5, 1>}, {transform_indices = @transform_4, window_bounds = array<i64: 3, 5, 1>}]} {
    %c0 = arith.constant 0 : index
    %c0_0 = arith.constant 0 : index
    %c0_1 = arith.constant 0 : index
    %0 = vector.load %arg1[%c0, %c0_0, %c0_1] : memref<3x1x7xf32, #tpu.memory_space<vmem>>, vector<3x1x7xf32>
    %c0_2 = arith.constant 0 : index
    %c0_3 = arith.constant 0 : index
    %c0_4 = arith.constant 0 : index
    %1 = vector.load %arg2[%c0_2, %c0_3, %c0_4] : memref<3x7x11xf32, #tpu.memory_space<vmem>>, vector<3x7x11xf32>
    %2 = vector.extract_strided_slice %1 {offsets = [0, 0, 8], sizes = [3, 7, 1], strides = [1, 1, 1]} : vector<3x7x11xf32> to vector<3x7x1xf32>
    %3 = tpu.iota {dimensions = array<i32: 1>} : vector<3x7x7xi32>
    %4 = tpu.iota {dimensions = array<i32: 2>} : vector<3x7x7xi32>
    %5 = vector.broadcast %2 : vector<3x7x1xf32> to vector<3x7x7xf32>
    %6 = vector.broadcast %0 : vector<3x1x7xf32> to vector<3x7x7xf32>
    %7 = arith.cmpf ogt, %5, %6 : vector<3x7x7xf32>
    %8 = vector.broadcast %2 : vector<3x7x1xf32> to vector<3x7x7xf32>
    %9 = vector.broadcast %0 : vector<3x1x7xf32> to vector<3x7x7xf32>
    %10 = arith.cmpf oeq, %8, %9 : vector<3x7x7xf32>
    %11 = arith.cmpi slt, %3, %4 : vector<3x7x7xi32>
    %12 = arith.andi %10, %11 : vector<3x7x7xi1>
    %13 = arith.ori %7, %12 : vector<3x7x7xi1>
    %14 = arith.extui %13 : vector<3x7x7xi1> to vector<3x7x7xi32>
    %15 = arith.sitofp %14 : vector<3x7x7xi32> to vector<3x7x7xf32>
    %cst = arith.constant 1.000000e+00 : f32
    %16 = vector.broadcast %cst : f32 to vector<3x1x7xf32>
    "tpu.trace_start"() <{level = 10 : i32, message = "gom,gmj->goj"}> : () -> ()
    %cst_5 = arith.constant dense<0.000000e+00> : vector<3x1x7xf32>
    %17 = tpu.matmul %16, %15, %cst_5 {dimension_numbers = #tpu.dot_dimension_numbers<[2], [1], [1], [2], [0, 0, 0, 1, 1, 2], [0], [0]>} : vector<3x1x7xf32>, vector<3x7x7xf32>, vector<3x1x7xf32> -> vector<3x1x7xf32>
    "tpu.trace_stop"() : () -> ()
    %18 = arith.fptosi %17 : vector<3x1x7xf32> to vector<3x1x7xi32>
    %19 = tpu.iota {dimensions = array<i32: 1>} : vector<3x5x7xi32>
    %20 = vector.broadcast %18 : vector<3x1x7xi32> to vector<3x5x7xi32>
    %21 = arith.cmpi eq, %20, %19 : vector<3x5x7xi32>
    %22 = arith.extui %21 : vector<3x5x7xi1> to vector<3x5x7xi32>
    %23 = arith.sitofp %22 : vector<3x5x7xi32> to vector<3x5x7xf32>
    "tpu.trace_start"() <{level = 10 : i32, message = "gkm,gmc->gkc"}> : () -> ()
    %cst_6 = arith.constant dense<0.000000e+00> : vector<3x5x11xf32>
    %24 = tpu.matmul %23, %1, %cst_6 {dimension_numbers = #tpu.dot_dimension_numbers<[2], [1], [1], [2], [0, 0, 0, 1, 1, 2], [0], [0]>} : vector<3x5x7xf32>, vector<3x7x11xf32>, vector<3x5x11xf32> -> vector<3x5x11xf32>
    "tpu.trace_stop"() : () -> ()
    %25 = vector.extract_strided_slice %24 {offsets = [0, 0, 0], sizes = [3, 5, 8], strides = [1, 1, 1]} : vector<3x5x11xf32> to vector<3x5x8xf32>
    %c0_7 = arith.constant 0 : index
    %c0_8 = arith.constant 0 : index
    %c0_9 = arith.constant 0 : index
    %26 = vector.load %arg3[%c0_7, %c0_8, %c0_9] : memref<3x5x8xf32, #tpu.memory_space<vmem>>, vector<3x5x8xf32>
    tpu.vector_store %arg3[%c0_7, %c0_8, %c0_9], %25 {strides = array<i32>} : memref<3x5x8xf32, #tpu.memory_space<vmem>>, vector<3x5x8xf32>,
    %27 = tpu.iota {dimensions = array<i32: 1>} : vector<3x5x1xi32>
    %28 = vector.extract_strided_slice %24 {offsets = [0, 0, 9], sizes = [3, 5, 1], strides = [1, 1, 1]} : vector<3x5x11xf32> to vector<3x5x1xf32>
    %c7_i32 = arith.constant 7 : i32
    %29 = vector.broadcast %c7_i32 : i32 to vector<3x5x1xi32>
    %30 = arith.cmpi slt, %27, %29 : vector<3x5x1xi32>
    %31 = arith.fptosi %28 : vector<3x5x1xf32> to vector<3x5x1xi32>
    %c-1_i32 = arith.constant -1 : i32
    %32 = vector.broadcast %c-1_i32 : i32 to vector<3x5x1xi32>
    %33 = arith.select %30, %31, %32 : vector<3x5x1xi1>, vector<3x5x1xi32>
    %c0_10 = arith.constant 0 : index
    %c0_11 = arith.constant 0 : index
    %c0_12 = arith.constant 0 : index
    %34 = vector.load %arg4[%c0_10, %c0_11, %c0_12] : memref<3x5x1xi32, #tpu.memory_space<vmem>>, vector<3x5x1xi32>
    tpu.vector_store %arg4[%c0_10, %c0_11, %c0_12], %33 {strides = array<i32>} : memref<3x5x1xi32, #tpu.memory_space<vmem>>, vector<3x5x1xi32>,
    %35 = vector.extract_strided_slice %24 {offsets = [0, 0, 10], sizes = [3, 5, 1], strides = [1, 1, 1]} : vector<3x5x11xf32> to vector<3x5x1xf32>
    %cst_13 = arith.constant 5.000000e-01 : f32
    %36 = vector.broadcast %cst_13 : f32 to vector<3x5x1xf32>
    %37 = arith.cmpf ogt, %35, %36 : vector<3x5x1xf32>
    %38 = arith.extui %37 : vector<3x5x1xi1> to vector<3x5x1xi32>
    %c0_14 = arith.constant 0 : index
    %c0_15 = arith.constant 0 : index
    %c0_16 = arith.constant 0 : index
    %39 = vector.load %arg5[%c0_14, %c0_15, %c0_16] : memref<3x5x1xi32, #tpu.memory_space<vmem>>, vector<3x5x1xi32>
    tpu.vector_store %arg5[%c0_14, %c0_15, %c0_16], %38 {strides = array<i32>} : memref<3x5x1xi32, #tpu.memory_space<vmem>>, vector<3x5x1xi32>,
    return
  }
  func.func @transform_0(%arg0: i32) -> (i32, i32, i32) {
    %c0_i32 = arith.constant 0 : i32
    %c0_i32_0 = arith.constant 0 : i32
    %c0_i32_1 = arith.constant 0 : i32
    return %arg0, %c0_i32, %c0_i32_0 : i32, i32, i32
  }
  func.func @transform_1(%arg0: i32) -> (i32, i32, i32) {
    %c0_i32 = arith.constant 0 : i32
    %c0_i32_0 = arith.constant 0 : i32
    %c0_i32_1 = arith.constant 0 : i32
    return %arg0, %c0_i32, %c0_i32_0 : i32, i32, i32
  }
  func.func @transform_2(%arg0: i32) -> (i32, i32, i32) {
    %c0_i32 = arith.constant 0 : i32
    %c0_i32_0 = arith.constant 0 : i32
    %c0_i32_1 = arith.constant 0 : i32
    return %arg0, %c0_i32, %c0_i32_0 : i32, i32, i32
  }
  func.func @transform_3(%arg0: i32) -> (i32, i32, i32) {
    %c0_i32 = arith.constant 0 : i32
    %c0_i32_0 = arith.constant 0 : i32
    %c0_i32_1 = arith.constant 0 : i32
    return %arg0, %c0_i32, %c0_i32_0 : i32, i32, i32
  }
  func.func @transform_4(%arg0: i32) -> (i32, i32, i32) {
    %c0_i32 = arith.constant 0 : i32
    %c0_i32_0 = arith.constant 0 : i32
    %c0_i32_1 = arith.constant 0 : i32
    return %arg0, %c0_i32, %c0_i32_0 : i32, i32, i32
  }
}

</mosaic_0001>

<llo_original>
// kernel: tpu_custom_call.1
$region0: #{tpu_custom_call.1}
  #allocation0 [shape = 'u32[]', space=smem, size = 0x4, offset = 0x4, fixed_abs, tag = 'smem constant byte address 0x4 - core index']
  #allocation1 [shape = 'u32[144,128]{1,0:T(1,128)}', space=vmem, size = 0x12000, scoped, tag = 'internal scratch']
  %s0 = inlined_call_operand.hbm [shape: f32[3,1,7], index: 0, kind: input, shape index: {}]
  %s1 = inlined_call_operand.hbm [shape: f32[3,7,11], index: 1, kind: input, shape index: {}]
  %s2 = inlined_call_operand.vmem [shape: f32[3,5,8], index: 2, kind: output, shape index: {0}]
  %s3 = inlined_call_operand.vmem [shape: s32[3,5,1], index: 3, kind: output, shape index: {1}]
  %s4 = inlined_call_operand.vmem [shape: s32[3,5,1], index: 4, kind: output, shape index: {2}]
  %5 = xla_tuple %s2, %s3, %s4
  %s6 = sld [smem:[#allocation0]]
  $region42: #{tpu_custom_call.1} parent=0
    _
  %s8 = ssub.s32 1, %s6
  %s9 = scalar_select 0, %s8, %s6
  $region1: #{tpu_custom_call.1} parent=0
    #allocation2 [shape = 'u8[1536]{0}', space=vmem, size = 0x800, scoped, tag = 'input window, operand 0, single buffered']
    #allocation3 [shape = 's32[1]{0}', space=sflag, size = 0x4, scoped, tag = 'scoped memory for tpu_custom_call.1']
    #allocation4 [shape = 'u8[12288]{0}', space=vmem, size = 0x3000, scoped, tag = 'input window, operand 1, single buffered']
    #allocation5 [shape = 's32[1]{0}', space=sflag, size = 0x4, scoped, tag = 'scoped memory for tpu_custom_call.1']
    %10 = vsyncpa [#allocation3], 0
    %11 = vsyncpa [#allocation5], 0
    // Predicated region
    $region2: #{tpu_custom_call.1} parent=1 // pred_check
      _
    $region3: #{tpu_custom_call.1} parent=1 // pred_check_branch
      %13 = sbr.rel (0) target = $region5
    $region4: #{tpu_custom_call.1} parent=1 // pred_region
      %s15 = ssub.s32 48, 48
      %16 = vsyncadd [#allocation3], %s15
      %s17 = sshll.u32 [#allocation2], 4
      %s18 = int_to_ptr.vmem [resolvable:$true] %s17
      %23 = dma.hbm_to_vmem [thread:$0]  %s0, 48, %s18, [#allocation3], 16, 16, 1
    $region5: #{tpu_custom_call.1} parent=1 // pred_fallthru
      _
    // Predicated region
    $region6: #{tpu_custom_call.1} parent=1 // pred_check
      _
    $region7: #{tpu_custom_call.1} parent=1 // pred_check_branch
      %25 = sbr.rel (0) target = $region9
    $region8: #{tpu_custom_call.1} parent=1 // pred_region
      %s27 = ssub.s32 384, 384
      %28 = vsyncadd [#allocation5], %s27
      %s29 = sshll.u32 [#allocation4], 4
      %s30 = int_to_ptr.vmem [resolvable:$true] %s29
      %35 = dma.hbm_to_vmem [thread:$0]  %s1, 384, %s30, [#allocation5], 128, 128, 8
    $region9: #{tpu_custom_call.1} parent=1 // pred_fallthru
      _
    // Predicated region
    $region10: #{tpu_custom_call.1} parent=1 // pred_check
      _
    $region11: #{tpu_custom_call.1} parent=1 // pred_check_branch
      %37 = sbr.rel (0) target = $region13
    $region12: #{tpu_custom_call.1} parent=1 // pred_region
      %38 = dma.done [#allocation3], 48
    $region13: #{tpu_custom_call.1} parent=1 // pred_fallthru
      _
    // Predicated region
    $region14: #{tpu_custom_call.1} parent=1 // pred_check
      _
    $region15: #{tpu_custom_call.1} parent=1 // pred_check_branch
      %40 = sbr.rel (0) target = $region17
    $region16: #{tpu_custom_call.1} parent=1 // pred_region
      %41 = dma.done [#allocation5], 384
    $region17: #{tpu_custom_call.1} parent=1 // pred_fallthru
      _
    %v42 = vld [vmem:[#allocation2] sm:$0x1]
    %v43 = vld [vmem:[#allocation2 + $0x1] sm:$0x1]
    %v44 = vld [vmem:[#allocation2 + $0x2] sm:$0x1]
    %v45 = vld [vmem:[#allocation4] sm:$0x7f]
    %v46 = vld [vmem:[#allocation4 + $0x8] sm:$0x7f]
    %v47 = vld [vmem:[#allocation4 + $0x10] sm:$0x7f]
    %v48 = vlaneseq
    %v49 = vshrl.u32 %v48, 7
    %v50 = vlaneseq
    %v51 = vand.u32 %v50, 127
    %53 = vset.pattern.permute.xlu0 8
    %54 = vperm.xlu0 %53, %v45
    %v55 = vpop.permute.xlu0 %54
    %58 = vset.pattern.permute.xlu0 8
    %59 = vperm.xlu0 %58, %v46
    %v60 = vpop.permute.xlu0 %59
    %63 = vset.pattern.permute.xlu0 8
    %64 = vperm.xlu0 %63, %v47
    %v65 = vpop.permute.xlu0 %64
    %v70 = vlaneseq
    %v71 = vshrl.u32 %v70, 7
    %v72 = vsub.s32 0, %v71
    %v73 = vrot.slane %v42, %v72
    %v74 = vlaneseq
    %v75 = vshrl.u32 %v74, 7
    %v76 = vsub.s32 0, %v75
    %v77 = vrot.slane %v43, %v76
    %v78 = vlaneseq
    %v79 = vshrl.u32 %v78, 7
    %v80 = vsub.s32 0, %v79
    %v81 = vrot.slane %v44, %v80
    %vm85 = vcmp.gt.f32.partialorder %v55, %v73
    %vm86 = vcmp.gt.f32.partialorder %v60, %v77
    %vm87 = vcmp.gt.f32.partialorder %v65, %v81
    %vm88 = vcmp.eq.f32.partialorder %v55, %v73
    %vm89 = vcmp.eq.f32.partialorder %v60, %v77
    %vm90 = vcmp.eq.f32.partialorder %v65, %v81
    %vm91 = vcmp.lt.s32.totalorder %v49, %v51
    %vm92 = vmand %vm88, %vm91
    %vm93 = vmand %vm89, %vm91
    %vm94 = vmand %vm90, %vm91
    %vm95 = vmor %vm85, %vm92
    %vm96 = vmor %vm86, %vm93
    %vm97 = vmor %vm87, %vm94
    %v98 = vsel %vm95, 1, 0
    %v99 = vsel %vm96, 1, 0
    %v100 = vsel %vm97, 1, 0
    %v101 = vcvt.s32.f32 %v98
    %v102 = vcvt.s32.f32 %v99
    %v103 = vcvt.s32.f32 %v100
    %vm104 = vcmask 56320
    %v106 = vsel %vm104, 1.0, 0
    %vm108 = vcmask 1046528
    %v110 = vsel %vm108, %v101, 0
    %112 = vmatprep.subr.mxu0 0.0
    %113 = vmatpush1.msra.mxu0 %v110
    %114 = vmatprep.subr.mxu0 0.0
    %115 = vmatpush1.msra.mxu0 0.0
    %116 = vmatprep.subr.mxu0 0.0
    %117 = vmatpush1.msra.mxu0 0.0
    %118 = vmatprep.subr.mxu0 0.0
    %119 = vmatpush1.msra.mxu0 0.0
    %120 = vmatprep.subr.mxu0 0.0
    %121 = vmatpush1.msra.mxu0 0.0
    %122 = vmatprep.subr.mxu0 0.0
    %123 = vmatpush1.msra.mxu0 0.0
    %124 = vmatprep.subr.mxu0 0.0
    %125 = vmatpush1.msra.mxu0 0.0
    %126 = vmatprep.subr.mxu0 0.0
    %127 = vmatpush1.msra.mxu0 0.0
    %128 = vmatprep.subr.mxu0 0.0
    %129 = vmatpush1.msra.mxu0 0.0
    %130 = vmatprep.subr.mxu0 0.0
    %131 = vmatpush1.msra.mxu0 0.0
    %132 = vmatprep.subr.mxu0 0.0
    %133 = vmatpush1.msra.mxu0 0.0
    %134 = vmatprep.subr.mxu0 0.0
    %135 = vmatpush1.msra.mxu0 0.0
    %136 = vmatprep.subr.mxu0 0.0
    %137 = vmatpush1.msra.mxu0 0.0
    %138 = vmatprep.subr.mxu0 0.0
    %139 = vmatpush1.msra.mxu0 0.0
    %140 = vmatprep.subr.mxu0 0.0
    %141 = vmatpush1.msra.mxu0 0.0
    %142 = vmatprep.subr.mxu0 0.0
    %143 = vmatpush1.msra.mxu0 0.0
    %144 = vmatprep.subr.mxu0 0.0
    %145 = vmatpush1.msra.mxu0 0.0
    %146 = vmatprep.subr.mxu0 0.0
    %147 = vmatpush1.msra.mxu0 0.0
    %148 = vmatprep.subr.mxu0 0.0
    %149 = vmatpush1.msra.mxu0 0.0
    %150 = vmatprep.subr.mxu0 0.0
    %151 = vmatpush1.msra.mxu0 0.0
    %152 = vmatprep.subr.mxu0 0.0
    %153 = vmatpush1.msra.mxu0 0.0
    %154 = vmatprep.subr.mxu0 0.0
    %155 = vmatpush1.msra.mxu0 0.0
    %156 = vmatprep.subr.mxu0 0.0
    %157 = vmatpush1.msra.mxu0 0.0
    %158 = vmatprep.subr.mxu0 0.0
    %159 = vmatpush1.msra.mxu0 0.0
    %160 = vmatprep.subr.mxu0 0.0
    %161 = vmatpush1.msra.mxu0 0.0
    %162 = vmatprep.subr.mxu0 0.0
    %163 = vmatpush1.msra.mxu0 0.0
    %164 = vmatprep.subr.mxu0 0.0
    %165 = vmatpush1.msra.mxu0 0.0
    %166 = vmatprep.subr.mxu0 0.0
    %167 = vmatpush1.msra.mxu0 0.0
    %168 = vmatprep.subr.mxu0 0.0
    %169 = vmatpush1.msra.mxu0 0.0
    %170 = vmatprep.subr.mxu0 0.0
    %171 = vmatpush1.msra.mxu0 0.0
    %172 = vmatprep.subr.mxu0 0.0
    %173 = vmatpush1.msra.mxu0 0.0
    %174 = vmatprep.subr.mxu0 0.0
    %175 = vmatpush1.msra.mxu0 0.0
    %176 = vmatprep.mubr.f32.mxu0 0.0
    %177 = vmatmul.mubr.f32.gmra.mrb[0].mxu0 %v106
    %v178 = vpop.f32.mrb[0].mxu0
    %v179 = vadd.f32 0.0, %v178
    %v180 = vpop.f32.mrb[0].mxu0
    %181 = vdwg.mxu0
    %v183 = vsel %vm108, %v102, 0
    %185 = vmatprep.subr.mxu0 0.0
    %186 = vmatpush1.msra.mxu0 %v183
    %187 = vmatprep.subr.mxu0 0.0
    %188 = vmatpush1.msra.mxu0 0.0
    %189 = vmatprep.subr.mxu0 0.0
    %190 = vmatpush1.msra.mxu0 0.0
    %191 = vmatprep.subr.mxu0 0.0
    %192 = vmatpush1.msra.mxu0 0.0
    %193 = vmatprep.subr.mxu0 0.0
    %194 = vmatpush1.msra.mxu0 0.0
    %195 = vmatprep.subr.mxu0 0.0
    %196 = vmatpush1.msra.mxu0 0.0
    %197 = vmatprep.subr.mxu0 0.0
    %198 = vmatpush1.msra.mxu0 0.0
    %199 = vmatprep.subr.mxu0 0.0
    %200 = vmatpush1.msra.mxu0 0.0
    %201 = vmatprep.subr.mxu0 0.0
    %202 = vmatpush1.msra.mxu0 0.0
    %203 = vmatprep.subr.mxu0 0.0
    %204 = vmatpush1.msra.mxu0 0.0
    %205 = vmatprep.subr.mxu0 0.0
    %206 = vmatpush1.msra.mxu0 0.0
    %207 = vmatprep.subr.mxu0 0.0
    %208 = vmatpush1.msra.mxu0 0.0
    %209 = vmatprep.subr.mxu0 0.0
    %210 = vmatpush1.msra.mxu0 0.0
    %211 = vmatprep.subr.mxu0 0.0
    %212 = vmatpush1.msra.mxu0 0.0
    %213 = vmatprep.subr.mxu0 0.0
    %214 = vmatpush1.msra.mxu0 0.0
    %215 = vmatprep.subr.mxu0 0.0
    %216 = vmatpush1.msra.mxu0 0.0
    %217 = vmatprep.subr.mxu0 0.0
    %218 = vmatpush1.msra.mxu0 0.0
    %219 = vmatprep.subr.mxu0 0.0
    %220 = vmatpush1.msra.mxu0 0.0
    %221 = vmatprep.subr.mxu0 0.0
    %222 = vmatpush1.msra.mxu0 0.0
    %223 = vmatprep.subr.mxu0 0.0
    %224 = vmatpush1.msra.mxu0 0.0
    %225 = vmatprep.subr.mxu0 0.0
    %226 = vmatpush1.msra.mxu0 0.0
    %227 = vmatprep.subr.mxu0 0.0
    %228 = vmatpush1.msra.mxu0 0.0
    %229 = vmatprep.subr.mxu0 0.0
    %230 = vmatpush1.msra.mxu0 0.0
    %231 = vmatprep.subr.mxu0 0.0
    %232 = vmatpush1.msra.mxu0 0.0
    %233 = vmatprep.subr.mxu0 0.0
    %234 = vmatpush1.msra.mxu0 0.0
    %235 = vmatprep.subr.mxu0 0.0
    %236 = vmatpush1.msra.mxu0 0.0
    %237 = vmatprep.subr.mxu0 0.0
    %238 = vmatpush1.msra.mxu0 0.0
    %239 = vmatprep.subr.mxu0 0.0
    %240 = vmatpush1.msra.mxu0 0.0
    %241 = vmatprep.subr.mxu0 0.0
    %242 = vmatpush1.msra.mxu0 0.0
    %243 = vmatprep.subr.mxu0 0.0
    %244 = vmatpush1.msra.mxu0 0.0
    %245 = vmatprep.subr.mxu0 0.0
    %246 = vmatpush1.msra.mxu0 0.0
    %247 = vmatprep.subr.mxu0 0.0
    %248 = vmatpush1.msra.mxu0 0.0
    %249 = vmatprep.mubr.f32.mxu0 0.0
    %250 = vmatmul.mubr.f32.gmra.mrb[0].mxu0 %v106
    %v251 = vpop.f32.mrb[0].mxu0
    %v252 = vadd.f32 0.0, %v251
    %v253 = vpop.f32.mrb[0].mxu0
    %254 = vdwg.mxu0
    %v256 = vsel %vm108, %v103, 0
    %258 = vmatprep.subr.mxu0 0.0
    %259 = vmatpush1.msra.mxu0 %v256
    %260 = vmatprep.subr.mxu0 0.0
    %261 = vmatpush1.msra.mxu0 0.0
    %262 = vmatprep.subr.mxu0 0.0
    %263 = vmatpush1.msra.mxu0 0.0
    %264 = vmatprep.subr.mxu0 0.0
    %265 = vmatpush1.msra.mxu0 0.0
    %266 = vmatprep.subr.mxu0 0.0
    %267 = vmatpush1.msra.mxu0 0.0
    %268 = vmatprep.subr.mxu0 0.0
    %269 = vmatpush1.msra.mxu0 0.0
    %270 = vmatprep.subr.mxu0 0.0
    %271 = vmatpush1.msra.mxu0 0.0
    %272 = vmatprep.subr.mxu0 0.0
    %273 = vmatpush1.msra.mxu0 0.0
    %274 = vmatprep.subr.mxu0 0.0
    %275 = vmatpush1.msra.mxu0 0.0
    %276 = vmatprep.subr.mxu0 0.0
    %277 = vmatpush1.msra.mxu0 0.0
    %278 = vmatprep.subr.mxu0 0.0
    %279 = vmatpush1.msra.mxu0 0.0
    %280 = vmatprep.subr.mxu0 0.0
    %281 = vmatpush1.msra.mxu0 0.0
    %282 = vmatprep.subr.mxu0 0.0
    %283 = vmatpush1.msra.mxu0 0.0
    %284 = vmatprep.subr.mxu0 0.0
    %285 = vmatpush1.msra.mxu0 0.0
    %286 = vmatprep.subr.mxu0 0.0
    %287 = vmatpush1.msra.mxu0 0.0
    %288 = vmatprep.subr.mxu0 0.0
    %289 = vmatpush1.msra.mxu0 0.0
    %290 = vmatprep.subr.mxu0 0.0
    %291 = vmatpush1.msra.mxu0 0.0
    %292 = vmatprep.subr.mxu0 0.0
    %293 = vmatpush1.msra.mxu0 0.0
    %294 = vmatprep.subr.mxu0 0.0
    %295 = vmatpush1.msra.mxu0 0.0
    %296 = vmatprep.subr.mxu0 0.0
    %297 = vmatpush1.msra.mxu0 0.0
    %298 = vmatprep.subr.mxu0 0.0
    %299 = vmatpush1.msra.mxu0 0.0
    %300 = vmatprep.subr.mxu0 0.0
    %301 = vmatpush1.msra.mxu0 0.0
    %302 = vmatprep.subr.mxu0 0.0
    %303 = vmatpush1.msra.mxu0 0.0
    %304 = vmatprep.subr.mxu0 0.0
    %305 = vmatpush1.msra.mxu0 0.0
    %306 = vmatprep.subr.mxu0 0.0
    %307 = vmatpush1.msra.mxu0 0.0
    %308 = vmatprep.subr.mxu0 0.0
    %309 = vmatpush1.msra.mxu0 0.0
    %310 = vmatprep.subr.mxu0 0.0
    %311 = vmatpush1.msra.mxu0 0.0
    %312 = vmatprep.subr.mxu0 0.0
    %313 = vmatpush1.msra.mxu0 0.0
    %314 = vmatprep.subr.mxu0 0.0
    %315 = vmatpush1.msra.mxu0 0.0
    %316 = vmatprep.subr.mxu0 0.0
    %317 = vmatpush1.msra.mxu0 0.0
    %318 = vmatprep.subr.mxu0 0.0
    %319 = vmatpush1.msra.mxu0 0.0
    %320 = vmatprep.subr.mxu0 0.0
    %321 = vmatpush1.msra.mxu0 0.0
    %322 = vmatprep.mubr.f32.mxu0 0.0
    %323 = vmatmul.mubr.f32.gmra.mrb[0].mxu0 %v106
    %v324 = vpop.f32.mrb[0].mxu0
    %v325 = vadd.f32 0.0, %v324
    %v326 = vpop.f32.mrb[0].mxu0
    %327 = vdwg.mxu0
    %v328 = vcvt.f32.s32.to.zero.pseudo %v179
    %v329 = vcvt.f32.s32.to.zero.pseudo %v252
    %v330 = vcvt.f32.s32.to.zero.pseudo %v325
    %v331 = vlaneseq
    %v332 = vshrl.u32 %v331, 7
    %v333 = vsub.s32 0, %v332
    %v334 = vrot.slane %v328, %v333
    %v335 = vlaneseq
    %v336 = vshrl.u32 %v335, 7
    %v337 = vsub.s32 0, %v336
    %v338 = vrot.slane %v329, %v337
    %v339 = vlaneseq
    %v340 = vshrl.u32 %v339, 7
    %v341 = vsub.s32 0, %v340
    %v342 = vrot.slane %v330, %v341
    %vm343 = vcmp.eq.s32.totalorder %v334, %v49
    %vm344 = vcmp.eq.s32.totalorder %v338, %v49
    %vm345 = vcmp.eq.s32.totalorder %v342, %v49
    %v346 = vsel %vm343, 1, 0
    %v347 = vsel %vm344, 1, 0
    %v348 = vsel %vm345, 1, 0
    %v349 = vcvt.s32.f32 %v346
    %v350 = vcvt.s32.f32 %v347
    %v351 = vcvt.s32.f32 %v348
    %v353 = vsel %vm104, %v349, 0
    %v355 = vsel %vm108, %v45, 0
    %357 = vmatprep.subr.mxu0 0.0
    %358 = vmatpush1.msra.mxu0 %v355
    %359 = vmatprep.subr.mxu0 0.0
    %360 = vmatpush1.msra.mxu0 0.0
    %361 = vmatprep.subr.mxu0 0.0
    %362 = vmatpush1.msra.mxu0 0.0
    %363 = vmatprep.subr.mxu0 0.0
    %364 = vmatpush1.msra.mxu0 0.0
    %365 = vmatprep.subr.mxu0 0.0
    %366 = vmatpush1.msra.mxu0 0.0
    %367 = vmatprep.subr.mxu0 0.0
    %368 = vmatpush1.msra.mxu0 0.0
    %369 = vmatprep.subr.mxu0 0.0
    %370 = vmatpush1.msra.mxu0 0.0
    %371 = vmatprep.subr.mxu0 0.0
    %372 = vmatpush1.msra.mxu0 0.0
    %373 = vmatprep.subr.mxu0 0.0
    %374 = vmatpush1.msra.mxu0 0.0
    %375 = vmatprep.subr.mxu0 0.0
    %376 = vmatpush1.msra.mxu0 0.0
    %377 = vmatprep.subr.mxu0 0.0
    %378 = vmatpush1.msra.mxu0 0.0
    %379 = vmatprep.subr.mxu0 0.0
    %380 = vmatpush1.msra.mxu0 0.0
    %381 = vmatprep.subr.mxu0 0.0
    %382 = vmatpush1.msra.mxu0 0.0
    %383 = vmatprep.subr.mxu0 0.0
    %384 = vmatpush1.msra.mxu0 0.0
    %385 = vmatprep.subr.mxu0 0.0
    %386 = vmatpush1.msra.mxu0 0.0
    %387 = vmatprep.subr.mxu0 0.0
    %388 = vmatpush1.msra.mxu0 0.0
    %389 = vmatprep.subr.mxu0 0.0
    %390 = vmatpush1.msra.mxu0 0.0
    %391 = vmatprep.subr.mxu0 0.0
    %392 = vmatpush1.msra.mxu0 0.0
    %393 = vmatprep.subr.mxu0 0.0
    %394 = vmatpush1.msra.mxu0 0.0
    %395 = vmatprep.subr.mxu0 0.0
    %396 = vmatpush1.msra.mxu0 0.0
    %397 = vmatprep.subr.mxu0 0.0
    %398 = vmatpush1.msra.mxu0 0.0
    %399 = vmatprep.subr.mxu0 0.0
    %400 = vmatpush1.msra.mxu0 0.0
    %401 = vmatprep.subr.mxu0 0.0
    %402 = vmatpush1.msra.mxu0 0.0
    %403 = vmatprep.subr.mxu0 0.0
    %404 = vmatpush1.msra.mxu0 0.0
    %405 = vmatprep.subr.mxu0 0.0
    %406 = vmatpush1.msra.mxu0 0.0
    %407 = vmatprep.subr.mxu0 0.0
    %408 = vmatpush1.msra.mxu0 0.0
    %409 = vmatprep.subr.mxu0 0.0
    %410 = vmatpush1.msra.mxu0 0.0
    %411 = vmatprep.subr.mxu0 0.0
    %412 = vmatpush1.msra.mxu0 0.0
    %413 = vmatprep.subr.mxu0 0.0
    %414 = vmatpush1.msra.mxu0 0.0
    %415 = vmatprep.subr.mxu0 0.0
    %416 = vmatpush1.msra.mxu0 0.0
    %417 = vmatprep.subr.mxu0 0.0
    %418 = vmatpush1.msra.mxu0 0.0
    %419 = vmatprep.subr.mxu0 0.0
    %420 = vmatpush1.msra.mxu0 0.0
    %421 = vmatprep.mubr.f32.mxu0 0.0
    %422 = vmatmul.mubr.f32.gmra.mrb[0].mxu0 %v353
    %v423 = vpop.f32.mrb[0].mxu0
    %v424 = vadd.f32 0.0, %v423
    %v425 = vpop.f32.mrb[0].mxu0
    %426 = vdwg.mxu0
    %v428 = vsel %vm104, %v350, 0
    %v430 = vsel %vm108, %v46, 0
    %432 = vmatprep.subr.mxu0 0.0
    %433 = vmatpush1.msra.mxu0 %v430
    %434 = vmatprep.subr.mxu0 0.0
    %435 = vmatpush1.msra.mxu0 0.0
    %436 = vmatprep.subr.mxu0 0.0
    %437 = vmatpush1.msra.mxu0 0.0
    %438 = vmatprep.subr.mxu0 0.0
    %439 = vmatpush1.msra.mxu0 0.0
    %440 = vmatprep.subr.mxu0 0.0
    %441 = vmatpush1.msra.mxu0 0.0
    %442 = vmatprep.subr.mxu0 0.0
    %443 = vmatpush1.msra.mxu0 0.0
    %444 = vmatprep.subr.mxu0 0.0
    %445 = vmatpush1.msra.mxu0 0.0
    %446 = vmatprep.subr.mxu0 0.0
    %447 = vmatpush1.msra.mxu0 0.0
    %448 = vmatprep.subr.mxu0 0.0
    %449 = vmatpush1.msra.mxu0 0.0
    %450 = vmatprep.subr.mxu0 0.0
    %451 = vmatpush1.msra.mxu0 0.0
    %452 = vmatprep.subr.mxu0 0.0
    %453 = vmatpush1.msra.mxu0 0.0
    %454 = vmatprep.subr.mxu0 0.0
    %455 = vmatpush1.msra.mxu0 0.0
    %456 = vmatprep.subr.mxu0 0.0
    %457 = vmatpush1.msra.mxu0 0.0
    %458 = vmatprep.subr.mxu0 0.0
    %459 = vmatpush1.msra.mxu0 0.0
    %460 = vmatprep.subr.mxu0 0.0
    %461 = vmatpush1.msra.mxu0 0.0
    %462 = vmatprep.subr.mxu0 0.0
    %463 = vmatpush1.msra.mxu0 0.0
    %464 = vmatprep.subr.mxu0 0.0
    %465 = vmatpush1.msra.mxu0 0.0
    %466 = vmatprep.subr.mxu0 0.0
    %467 = vmatpush1.msra.mxu0 0.0
    %468 = vmatprep.subr.mxu0 0.0
    %469 = vmatpush1.msra.mxu0 0.0
    %470 = vmatprep.subr.mxu0 0.0
    %471 = vmatpush1.msra.mxu0 0.0
    %472 = vmatprep.subr.mxu0 0.0
    %473 = vmatpush1.msra.mxu0 0.0
    %474 = vmatprep.subr.mxu0 0.0
    %475 = vmatpush1.msra.mxu0 0.0
    %476 = vmatprep.subr.mxu0 0.0
    %477 = vmatpush1.msra.mxu0 0.0
    %478 = vmatprep.subr.mxu0 0.0
    %479 = vmatpush1.msra.mxu0 0.0
    %480 = vmatprep.subr.mxu0 0.0
    %481 = vmatpush1.msra.mxu0 0.0
    %482 = vmatprep.subr.mxu0 0.0
    %483 = vmatpush1.msra.mxu0 0.0
    %484 = vmatprep.subr.mxu0 0.0
    %485 = vmatpush1.msra.mxu0 0.0
    %486 = vmatprep.subr.mxu0 0.0
    %487 = vmatpush1.msra.mxu0 0.0
    %488 = vmatprep.subr.mxu0 0.0
    %489 = vmatpush1.msra.mxu0 0.0
    %490 = vmatprep.subr.mxu0 0.0
    %491 = vmatpush1.msra.mxu0 0.0
    %492 = vmatprep.subr.mxu0 0.0
    %493 = vmatpush1.msra.mxu0 0.0
    %494 = vmatprep.subr.mxu0 0.0
    %495 = vmatpush1.msra.mxu0 0.0
    %496 = vmatprep.mubr.f32.mxu0 0.0
    %497 = vmatmul.mubr.f32.gmra.mrb[0].mxu0 %v428
    %v498 = vpop.f32.mrb[0].mxu0
    %v499 = vadd.f32 0.0, %v498
    %v500 = vpop.f32.mrb[0].mxu0
    %501 = vdwg.mxu0
    %v503 = vsel %vm104, %v351, 0
    %v505 = vsel %vm108, %v47, 0
    %507 = vmatprep.subr.mxu0 0.0
    %508 = vmatpush1.msra.mxu0 %v505
    %509 = vmatprep.subr.mxu0 0.0
    %510 = vmatpush1.msra.mxu0 0.0
    %511 = vmatprep.subr.mxu0 0.0
    %512 = vmatpush1.msra.mxu0 0.0
    %513 = vmatprep.subr.mxu0 0.0
    %514 = vmatpush1.msra.mxu0 0.0
    %515 = vmatprep.subr.mxu0 0.0
    %516 = vmatpush1.msra.mxu0 0.0
    %517 = vmatprep.subr.mxu0 0.0
    %518 = vmatpush1.msra.mxu0 0.0
    %519 = vmatprep.subr.mxu0 0.0
    %520 = vmatpush1.msra.mxu0 0.0
    %521 = vmatprep.subr.mxu0 0.0
    %522 = vmatpush1.msra.mxu0 0.0
    %523 = vmatprep.subr.mxu0 0.0
    %524 = vmatpush1.msra.mxu0 0.0
    %525 = vmatprep.subr.mxu0 0.0
    %526 = vmatpush1.msra.mxu0 0.0
    %527 = vmatprep.subr.mxu0 0.0
    %528 = vmatpush1.msra.mxu0 0.0
    %529 = vmatprep.subr.mxu0 0.0
    %530 = vmatpush1.msra.mxu0 0.0
    %531 = vmatprep.subr.mxu0 0.0
    %532 = vmatpush1.msra.mxu0 0.0
    %533 = vmatprep.subr.mxu0 0.0
    %534 = vmatpush1.msra.mxu0 0.0
    %535 = vmatprep.subr.mxu0 0.0
    %536 = vmatpush1.msra.mxu0 0.0
    %537 = vmatprep.subr.mxu0 0.0
    %538 = vmatpush1.msra.mxu0 0.0
    %539 = vmatprep.subr.mxu0 0.0
    %540 = vmatpush1.msra.mxu0 0.0
    %541 = vmatprep.subr.mxu0 0.0
    %542 = vmatpush1.msra.mxu0 0.0
    %543 = vmatprep.subr.mxu0 0.0
    %544 = vmatpush1.msra.mxu0 0.0
    %545 = vmatprep.subr.mxu0 0.0
    %546 = vmatpush1.msra.mxu0 0.0
    %547 = vmatprep.subr.mxu0 0.0
    %548 = vmatpush1.msra.mxu0 0.0
    %549 = vmatprep.subr.mxu0 0.0
    %550 = vmatpush1.msra.mxu0 0.0
    %551 = vmatprep.subr.mxu0 0.0
    %552 = vmatpush1.msra.mxu0 0.0
    %553 = vmatprep.subr.mxu0 0.0
    %554 = vmatpush1.msra.mxu0 0.0
    %555 = vmatprep.subr.mxu0 0.0
    %556 = vmatpush1.msra.mxu0 0.0
    %557 = vmatprep.subr.mxu0 0.0
    %558 = vmatpush1.msra.mxu0 0.0
    %559 = vmatprep.subr.mxu0 0.0
    %560 = vmatpush1.msra.mxu0 0.0
    %561 = vmatprep.subr.mxu0 0.0
    %562 = vmatpush1.msra.mxu0 0.0
    %563 = vmatprep.subr.mxu0 0.0
    %564 = vmatpush1.msra.mxu0 0.0
    %565 = vmatprep.subr.mxu0 0.0
    %566 = vmatpush1.msra.mxu0 0.0
    %567 = vmatprep.subr.mxu0 0.0
    %568 = vmatpush1.msra.mxu0 0.0
    %569 = vmatprep.subr.mxu0 0.0
    %570 = vmatpush1.msra.mxu0 0.0
    %571 = vmatprep.mubr.f32.mxu0 0.0
    %572 = vmatmul.mubr.f32.gmra.mrb[0].mxu0 %v503
    %v573 = vpop.f32.mrb[0].mxu0
    %v574 = vadd.f32 0.0, %v573
    %v575 = vpop.f32.mrb[0].mxu0
    %576 = vdwg.mxu0
    %vm577 = vcmask 61440
    %578 = vst.msk [vmem:[%s2] sm:$0x1f] %vm577, %v424
    %579 = vst.msk [vmem:[%s2 + $0x8] sm:$0x1f] %vm577, %v499
    %580 = vst.msk [vmem:[%s2 + $0x10] sm:$0x1f] %vm577, %v574
    %vm581 = vcmp.lt.s32.totalorder %v49, 7
    %v582 = vcvt.f32.s32.to.zero.pseudo %v424
    %v583 = vcvt.f32.s32.to.zero.pseudo %v499
    %v584 = vcvt.f32.s32.to.zero.pseudo %v574
    %v585 = vsel %vm581, %v582, 4294967295
    %v586 = vsel %vm581, %v583, 4294967295
    %v587 = vsel %vm581, %v584, 4294967295
    %588 = vrot.lane.b32.xlu0 %v585, 119
    %v589 = vpop.permute.xlu0 %588
    %590 = vrot.lane.b32.xlu0 %v586, 119
    %v591 = vpop.permute.xlu0 %590
    %592 = vrot.lane.b32.xlu0 %v587, 119
    %v593 = vpop.permute.xlu0 %592
    %vm594 = vcmask 4096
    %595 = vst.msk [vmem:[%s3] sm:$0x1f] %vm594, %v589
    %596 = vst.msk [vmem:[%s3 + $0x8] sm:$0x1f] %vm594, %v591
    %597 = vst.msk [vmem:[%s3 + $0x10] sm:$0x1f] %vm594, %v593
    %vm598 = vcmp.gt.f32.partialorder %v424, 0.5
    %vm599 = vcmp.gt.f32.partialorder %v499, 0.5
    %vm600 = vcmp.gt.f32.partialorder %v574, 0.5
    %v601 = vsel %vm598, 1, 0
    %v602 = vsel %vm599, 1, 0
    %v603 = vsel %vm600, 1, 0
    %604 = vrot.lane.b32.xlu0 %v601, 118
    %v605 = vpop.permute.xlu0 %604
    %606 = vrot.lane.b32.xlu0 %v602, 118
    %v607 = vpop.permute.xlu0 %606
    %608 = vrot.lane.b32.xlu0 %v603, 118
    %v609 = vpop.permute.xlu0 %608
    %610 = vst.msk [vmem:[%s4] sm:$0x1f] %vm594, %v605
    %611 = vst.msk [vmem:[%s4 + $0x8] sm:$0x1f] %vm594, %v607
    %612 = vst.msk [vmem:[%s4 + $0x10] sm:$0x1f] %vm594, %v609
    // Predicated region
    $region18: #{tpu_custom_call.1} parent=1 // pred_check
      _
    $region19: #{tpu_custom_call.1} parent=1 // pred_check_branch
      %614 = sbr.rel (0) target = $region21
    $region20: #{tpu_custom_call.1} parent=1 // pred_region
      _
    $region21: #{tpu_custom_call.1} parent=1 // pred_fallthru
      _
    // Predicated region
    $region22: #{tpu_custom_call.1} parent=1 // pred_check
      _
    $region23: #{tpu_custom_call.1} parent=1 // pred_check_branch
      %616 = sbr.rel (0) target = $region25
    $region24: #{tpu_custom_call.1} parent=1 // pred_region
      _
    $region25: #{tpu_custom_call.1} parent=1 // pred_fallthru
      _
    // Predicated region
    $region26: #{tpu_custom_call.1} parent=1 // pred_check
      _
    $region27: #{tpu_custom_call.1} parent=1 // pred_check_branch
      %618 = sbr.rel (0) target = $region29
    $region28: #{tpu_custom_call.1} parent=1 // pred_region
      _
    $region29: #{tpu_custom_call.1} parent=1 // pred_fallthru
      _
    // Predicated region
    $region30: #{tpu_custom_call.1} parent=1 // pred_check
      _
    $region31: #{tpu_custom_call.1} parent=1 // pred_check_branch
      %620 = sbr.rel (0) target = $region33
    $region32: #{tpu_custom_call.1} parent=1 // pred_region
      _
    $region33: #{tpu_custom_call.1} parent=1 // pred_fallthru
      _
    // Predicated region
    $region34: #{tpu_custom_call.1} parent=1 // pred_check
      _
    $region35: #{tpu_custom_call.1} parent=1 // pred_check_branch
      %622 = sbr.rel (0) target = $region37
    $region36: #{tpu_custom_call.1} parent=1 // pred_region
      _
    $region37: #{tpu_custom_call.1} parent=1 // pred_fallthru
      _
    // Predicated region
    $region38: #{tpu_custom_call.1} parent=1 // pred_check
      _
    $region39: #{tpu_custom_call.1} parent=1 // pred_check_branch
      %624 = sbr.rel (0) target = $region41
    $region40: #{tpu_custom_call.1} parent=1 // pred_region
      _
    $region41: #{tpu_custom_call.1} parent=1 // pred_fallthru
      _
    %625 = vsyncpa [#allocation3], 1
    %626 = vsyncpa [#allocation5], 1

</llo_original>
